<compile_context>
chip_gen: v6e
topology: v6e:2x2x1
jax: 0.10.0
libtpu: 0.0.40
codegen_flags: <defaults>
</compile_context>

<pallas_src>
import numpy as np
import jax
import jax.numpy as jnp
from jax.experimental import pallas as pl
from jax.experimental.pallas import tpu as pltpu

LANE = 128


def _round_up(x, m):
    return (x + m - 1) // m * m


def _hardswish(x):
    # PyTorch nn.Hardswish: x * relu6(x + 3) / 6
    return x * jnp.clip(x + 3.0, 0.0, 6.0) * (1.0 / 6.0)


# ---------------------------------------------------------------------------
# Kernel
# ---------------------------------------------------------------------------
def critic_twin_kernel(s_ref, a_ref,
                       w1s_ref, w1a_ref, b1_ref,   # net_sa[0], split over [state|action]
                       w2_ref, b2_ref,             # net_sa[2]
                       wqa_ref, bqa_ref,           # net_q1[0] | net_q2[0] stacked on lanes
                       wqb_ref, bqb_ref,           # net_q1[2] / net_q2[2] as (2, P) rows
                       q_ref):                     # out: (BLOCK_B, 2) = [q1 | q2]
    s = s_ref[...]                                  # (B, S) f32
    a = a_ref[...]                                  # (B, A) f32

    # net_sa: Linear -> ReLU -> Linear -> ReLU
    # cat([s, a], 1) @ W1  ==  s @ W1_s + a @ W1_a   (concat fused away)
    h = (jnp.dot(s, w1s_ref[...], preferred_element_type=jnp.float32)
         + jnp.dot(a, w1a_ref[...], preferred_element_type=jnp.float32)
         + b1_ref[...])
    h = jnp.maximum(h, 0.0)
    f = jnp.dot(h.astype(jnp.bfloat16), w2_ref[...],
                preferred_element_type=jnp.float32) + b2_ref[...]
    f = jnp.maximum(f, 0.0)                         # shared trunk (B, P)

    # both heads' first Linear in one matmul, then Hardswish
    z = jnp.dot(f.astype(jnp.bfloat16), wqa_ref[...],
                preferred_element_type=jnp.float32) + bqa_ref[...]   # (B, 2P)
    z = _hardswish(z)

    # final (P, 1) layers as VPU multiply + lane reduction (skip N=1 matmul)
    P = wqb_ref.shape[1]
    q1 = jnp.sum(z[:, :P] * wqb_ref[0:1, :], axis=-1, keepdims=True)
    q2 = jnp.sum(z[:, P:] * wqb_ref[1:2, :], axis=-1, keepdims=True)
    q_ref[:, 0:1] = q1 + bqb_ref[:, 0:1]
    q_ref[:, 1:2] = q2 + bqb_ref[:, 1:2]


# ---------------------------------------------------------------------------
# Wrappers
# ---------------------------------------------------------------------------
def critic_twin_q1_q2(state, action, packed, *, block_b=2048):
    """Fused Pallas forward of both critics: returns (Q1, Q2), each (B, 1) f32."""
    B, S = state.shape
    A = action.shape[1]
    block_b = max(8, min(block_b, _round_up(B, 8)))   # multiple of 8 (f32 sublanes)
    grid = (pl.cdiv(B, block_b),)

    def act_spec(feat):
        return pl.BlockSpec((block_b, feat), lambda i: (i, 0))

    def const_spec(arr):  # weights/biases: same block every step -> stay resident
        return pl.BlockSpec(arr.shape, lambda i: (0, 0))

    weights = (packed["w1s"], packed["w1a"], packed["b1"],
               packed["w2"], packed["b2"],
               packed["wqa"], packed["bqa"],
               packed["wqb"], packed["bqb"])

    q = pl.pallas_call(
        critic_twin_kernel,
        out_shape=jax.ShapeDtypeStruct((B, 2), jnp.float32),
        grid=grid,
        in_specs=[act_spec(S), act_spec(A)] + [const_spec(w) for w in weights],
        out_specs=pl.BlockSpec((block_b, 2), lambda i: (i, 0)),
        compiler_params=pltpu.CompilerParams(
            dimension_semantics=("parallel",)),   # v7x: batch axis over both TCs
    )(state, action, *weights)
    return q[:, 0:1], q[:, 1:2]


def critic_twin_forward(state, action, packed, **kw):
    """Pallas equivalent of CriticTwin.forward(state, action) -> Q1."""
    return critic_twin_q1_q2(state, action, packed, **kw)[0]


# ---------------------------------------------------------------------------
# Parameters
# ---------------------------------------------------------------------------
def _init_linear(key, in_dim, out_dim):
    """Deterministic PyTorch-style Linear init: U(-1/sqrt(in), 1/sqrt(in))."""
    bound = 1.0 / np.sqrt(in_dim)
    kw, kb = jax.random.split(key)
    w = jax.random.uniform(kw, (in_dim, out_dim), jnp.float32, -bound, bound)
    b = jax.random.uniform(kb, (1, out_dim), jnp.float32, -bound, bound)
    return w, b


def make_params(key, mid_dim, state_dim, action_dim):
    """PyTorch-layout f32 params: weights stored pre-transposed as (in, out)."""
    k1, k2, k3, k4, k5, k6 = jax.random.split(key, 6)
    return dict(
        sa0=_init_linear(k1, state_dim + action_dim, mid_dim),
        sa2=_init_linear(k2, mid_dim, mid_dim),
        q1a=_init_linear(k3, mid_dim, mid_dim),
        q1b=_init_linear(k4, mid_dim, 1),
        q2a=_init_linear(k5, mid_dim, mid_dim),
        q2b=_init_linear(k6, mid_dim, 1),
    )


def pack_params(raw, state_dim, mid_dim, weight_dtype=jnp.bfloat16):
    """One-time host-side repack: split W1, zero-pad hidden dim to 128 lanes,
    stack the two Q heads, cast the big square weights to bf16 (f32 accum)."""
    P = _round_up(mid_dim, LANE)

    def pad_cols(x, n): return jnp.pad(x, ((0, 0), (0, n - x.shape[1])))
    def pad_rows(x, n): return jnp.pad(x, ((0, n - x.shape[0]), (0, 0)))

    w1, b1 = raw["sa0"]
    w2, b2 = raw["sa2"]
    wq1a, bq1a = raw["q1a"]
    wq1b, bq1b = raw["q1b"]
    wq2a, bq2a = raw["q2a"]
    wq2b, bq2b = raw["q2b"]

    return dict(
        w1s=pad_cols(w1[:state_dim], P),                       # (S, P)  f32 (tiny)
        w1a=pad_cols(w1[state_dim:], P),                       # (A, P)  f32 (tiny)
        b1=pad_cols(b1, P),                                    # (1, P)  f32
        w2=pad_cols(pad_rows(w2, P), P).astype(weight_dtype),  # (P, P)  bf16
        b2=pad_cols(b2, P),                                    # (1, P)  f32
        wqa=jnp.concatenate([pad_cols(pad_rows(wq1a, P), P),
                             pad_cols(pad_rows(wq2a, P), P)],
                            axis=1).astype(weight_dtype),      # (P, 2P) bf16
        bqa=jnp.concatenate([pad_cols(bq1a, P),
                             pad_cols(bq2a, P)], axis=1),      # (1, 2P) f32
        wqb=jnp.concatenate([pad_rows(wq1b, P).T,
                             pad_rows(wq2b, P).T], axis=0),    # (2, P)  f32
        bqb=jnp.concatenate([bq1b, bq2b], axis=1),             # (1, 2)  f32
    )


# ---------------------------------------------------------------------------
# References for correctness checking
# ---------------------------------------------------------------------------
def _reference_f32(state, action, raw):
    """Pure-f32 PyTorch-equivalent math (unpadded, unsplit)."""
    w1, b1 = raw["sa0"]; w2, b2 = raw["sa2"]
    wq1a, bq1a = raw["q1a"]; wq1b, bq1b = raw["q1b"]
    wq2a, bq2a = raw["q2a"]; wq2b, bq2b = raw["q2b"]
    x = jnp.concatenate([state, action], axis=1)
    f = jnp.maximum(jnp.maximum(x @ w1 + b1, 0.0) @ w2 + b2, 0.0)
    return (_hardswish(f @ wq1a + bq1a) @ wq1b + bq1b,
            _hardswish(f @ wq2a + bq2a) @ wq2b + bq2b)


def _reference_matched(state, action, packed):
    """Same arithmetic path as the kernel (bf16-rounded operands, f32 accum)."""
    def bf(x): return x.astype(jnp.bfloat16).astype(jnp.float32)
    w2 = packed["w2"].astype(jnp.float32)
    wqa = packed["wqa"].astype(jnp.float32)
    h = jnp.maximum(state @ packed["w1s"] + action @ packed["w1a"] + packed["b1"], 0.0)
    f = jnp.maximum(bf(h) @ w2 + packed["b2"], 0.0)
    z = _hardswish(bf(f) @ wqa + packed["bqa"])
    P = packed["wqb"].shape[1]
    q1 = jnp.sum(z[:, :P] * packed["wqb"][0:1], axis=-1, keepdims=True) + packed["bqb"][:, 0:1]
    q2 = jnp.sum(z[:, P:] * packed["wqb"][1:2], axis=-1, keepdims=True) + packed["bqb"][:, 1:2]
    return q1, q2


if __name__ == "__main__":
    mid_dim, state_dim, action_dim, batch = 32, 12, 4, 64
    block_b = 32   # small here to exercise a 2-step batch grid; use >=2048 at real sizes

    key = jax.random.PRNGKey(0)
    k_params, k_state, k_action = jax.random.split(key, 3)

    raw = make_params(k_params, mid_dim, state_dim, action_dim)
    packed = pack_params(raw, state_dim, mid_dim)

    state = jax.random.normal(k_state, (batch, state_dim), jnp.float32)
    action = jax.random.normal(k_action, (batch, action_dim), jnp.float32)

    q1, q2 = critic_twin_q1_q2(state, action, packed, block_b=block_b)
    (q1, q2) = jax.block_until_ready((q1, q2))
    assert q1.shape == (batch, 1) and q2.shape == (batch, 1)

    # Tight check vs a reference doing the same (bf16-weight, f32-accum) math.
    m1, m2 = _reference_matched(state, action, packed)
    np.testing.assert_allclose(np.asarray(q1), np.asarray(m1), rtol=1e-3, atol=1e-3)
    np.testing.assert_allclose(np.asarray(q2), np.asarray(m2), rtol=1e-3, atol=1e-3)

    # Sanity check vs the pure-f32 PyTorch-equivalent math (bf16 weight rounding).
    r1, r2 = _reference_f32(state, action, raw)
    np.testing.assert_allclose(np.asarray(q1), np.asarray(r1), rtol=2e-2, atol=2e-2)
    np.testing.assert_allclose(np.asarray(q2), np.asarray(r2), rtol=2e-2, atol=2e-2)

    # forward() path (Q1 only) must agree with the fused twin output.
    fq1 = jax.block_until_ready(critic_twin_forward(state, action, packed, block_b=block_b))
    np.testing.assert_allclose(np.asarray(fq1), np.asarray(q1), rtol=0, atol=0)

    print("KERNEL_OK")
</pallas_src>

<mosaic_0001>
module attributes {stable_mosaic.version = 11 : i64} {
  func.func @critic_twin_kernel(%arg0: i32, %arg1: memref<32x12xf32, #tpu.memory_space<vmem>>, %arg2: memref<32x4xf32, #tpu.memory_space<vmem>>, %arg3: memref<12x128xf32, #tpu.memory_space<vmem>>, %arg4: memref<4x128xf32, #tpu.memory_space<vmem>>, %arg5: memref<1x128xf32, #tpu.memory_space<vmem>>, %arg6: memref<128x128xbf16, #tpu.memory_space<vmem>>, %arg7: memref<1x128xf32, #tpu.memory_space<vmem>>, %arg8: memref<128x256xbf16, #tpu.memory_space<vmem>>, %arg9: memref<1x256xf32, #tpu.memory_space<vmem>>, %arg10: memref<2x128xf32, #tpu.memory_space<vmem>>, %arg11: memref<1x2xf32, #tpu.memory_space<vmem>>, %arg12: memref<32x2xf32, #tpu.memory_space<vmem>>) attributes {dimension_semantics = [#tpu.dimension_semantics<parallel>], iteration_bounds = array<i64: 2>, scalar_prefetch = 0 : i64, scratch_operands = 0 : i64, tpu.core_type = #tpu.core_type<tc>, window_params = [{transform_indices = @transform_0, window_bounds = array<i64: 32, 12>}, {transform_indices = @transform_1, window_bounds = array<i64: 32, 4>}, {pipeline_mode = #tpu.pipeline_mode<synchronous>, transform_indices = @transform_2, window_bounds = array<i64: 12, 128>}, {pipeline_mode = #tpu.pipeline_mode<synchronous>, transform_indices = @transform_3, window_bounds = array<i64: 4, 128>}, {pipeline_mode = #tpu.pipeline_mode<synchronous>, transform_indices = @transform_4, window_bounds = array<i64: 1, 128>}, {pipeline_mode = #tpu.pipeline_mode<synchronous>, transform_indices = @transform_5, window_bounds = array<i64: 128, 128>}, {pipeline_mode = #tpu.pipeline_mode<synchronous>, transform_indices = @transform_6, window_bounds = array<i64: 1, 128>}, {pipeline_mode = #tpu.pipeline_mode<synchronous>, transform_indices = @transform_7, window_bounds = array<i64: 128, 256>}, {pipeline_mode = #tpu.pipeline_mode<synchronous>, transform_indices = @transform_8, window_bounds = array<i64: 1, 256>}, {pipeline_mode = #tpu.pipeline_mode<synchronous>, transform_indices = @transform_9, window_bounds = array<i64: 2, 128>}, {pipeline_mode = #tpu.pipeline_mode<synchronous>, transform_indices = @transform_10, window_bounds = array<i64: 1, 2>}, {transform_indices = @transform_11, window_bounds = array<i64: 32, 2>}]} {
    %c0 = arith.constant 0 : index
    %c0_0 = arith.constant 0 : index
    %0 = vector.load %arg1[%c0, %c0_0] : memref<32x12xf32, #tpu.memory_space<vmem>>, vector<32x12xf32>
    %c0_1 = arith.constant 0 : index
    %c0_2 = arith.constant 0 : index
    %1 = vector.load %arg2[%c0_1, %c0_2] : memref<32x4xf32, #tpu.memory_space<vmem>>, vector<32x4xf32>
    %c0_3 = arith.constant 0 : index
    %c0_4 = arith.constant 0 : index
    %2 = vector.load %arg3[%c0_3, %c0_4] : memref<12x128xf32, #tpu.memory_space<vmem>>, vector<12x128xf32>
    %cst = arith.constant dense<0.000000e+00> : vector<32x128xf32>
    %3 = tpu.matmul %0, %2, %cst {dimension_numbers = #tpu.dot_dimension_numbers<[1], [0], [0], [1], [0, 0, 1, 1], [], []>} : vector<32x12xf32>, vector<12x128xf32>, vector<32x128xf32> -> vector<32x128xf32>
    %c0_5 = arith.constant 0 : index
    %c0_6 = arith.constant 0 : index
    %4 = vector.load %arg4[%c0_5, %c0_6] : memref<4x128xf32, #tpu.memory_space<vmem>>, vector<4x128xf32>
    %cst_7 = arith.constant dense<0.000000e+00> : vector<32x128xf32>
    %5 = tpu.matmul %1, %4, %cst_7 {dimension_numbers = #tpu.dot_dimension_numbers<[1], [0], [0], [1], [0, 0, 1, 1], [], []>} : vector<32x4xf32>, vector<4x128xf32>, vector<32x128xf32> -> vector<32x128xf32>
    %6 = arith.addf %3, %5 : vector<32x128xf32>
    %c0_8 = arith.constant 0 : index
    %c0_9 = arith.constant 0 : index
    %7 = vector.load %arg5[%c0_8, %c0_9] : memref<1x128xf32, #tpu.memory_space<vmem>>, vector<1x128xf32>
    %8 = vector.broadcast %7 : vector<1x128xf32> to vector<32x128xf32>
    %9 = arith.addf %6, %8 : vector<32x128xf32>
    %cst_10 = arith.constant 0.000000e+00 : f32
    %10 = vector.broadcast %cst_10 : f32 to vector<32x128xf32>
    %11 = arith.maximumf %9, %10 : vector<32x128xf32>
    %12 = arith.truncf %11 : vector<32x128xf32> to vector<32x128xbf16>
    %c0_11 = arith.constant 0 : index
    %c0_12 = arith.constant 0 : index
    %13 = vector.load %arg6[%c0_11, %c0_12] : memref<128x128xbf16, #tpu.memory_space<vmem>>, vector<128x128xbf16>
    %cst_13 = arith.constant dense<0.000000e+00> : vector<32x128xf32>
    %14 = tpu.matmul %12, %13, %cst_13 {dimension_numbers = #tpu.dot_dimension_numbers<[1], [0], [0], [1], [0, 0, 1, 1], [], []>} : vector<32x128xbf16>, vector<128x128xbf16>, vector<32x128xf32> -> vector<32x128xf32>
    %c0_14 = arith.constant 0 : index
    %c0_15 = arith.constant 0 : index
    %15 = vector.load %arg7[%c0_14, %c0_15] : memref<1x128xf32, #tpu.memory_space<vmem>>, vector<1x128xf32>
    %16 = vector.broadcast %15 : vector<1x128xf32> to vector<32x128xf32>
    %17 = arith.addf %14, %16 : vector<32x128xf32>
    %cst_16 = arith.constant 0.000000e+00 : f32
    %18 = vector.broadcast %cst_16 : f32 to vector<32x128xf32>
    %19 = arith.maximumf %17, %18 : vector<32x128xf32>
    %20 = arith.truncf %19 : vector<32x128xf32> to vector<32x128xbf16>
    %c0_17 = arith.constant 0 : index
    %c0_18 = arith.constant 0 : index
    %21 = vector.load %arg8[%c0_17, %c0_18] : memref<128x256xbf16, #tpu.memory_space<vmem>>, vector<128x256xbf16>
    %cst_19 = arith.constant dense<0.000000e+00> : vector<32x256xf32>
    %22 = tpu.matmul %20, %21, %cst_19 {dimension_numbers = #tpu.dot_dimension_numbers<[1], [0], [0], [1], [0, 0, 1, 1], [], []>} : vector<32x128xbf16>, vector<128x256xbf16>, vector<32x256xf32> -> vector<32x256xf32>
    %c0_20 = arith.constant 0 : index
    %c0_21 = arith.constant 0 : index
    %23 = vector.load %arg9[%c0_20, %c0_21] : memref<1x256xf32, #tpu.memory_space<vmem>>, vector<1x256xf32>
    %24 = vector.broadcast %23 : vector<1x256xf32> to vector<32x256xf32>
    %25 = arith.addf %22, %24 : vector<32x256xf32>
    %cst_22 = arith.constant 3.000000e+00 : f32
    %26 = vector.broadcast %cst_22 : f32 to vector<32x256xf32>
    %27 = arith.addf %25, %26 : vector<32x256xf32>
    %cst_23 = arith.constant 0.000000e+00 : f32
    %cst_24 = arith.constant 6.000000e+00 : f32
    %28 = vector.broadcast %cst_23 : f32 to vector<32x256xf32>
    %29 = arith.maximumf %28, %27 : vector<32x256xf32>
    %30 = vector.broadcast %cst_24 : f32 to vector<32x256xf32>
    %31 = arith.minimumf %30, %29 : vector<32x256xf32>
    %32 = arith.mulf %25, %31 : vector<32x256xf32>
    %cst_25 = arith.constant 0.166666672 : f32
    %33 = vector.broadcast %cst_25 : f32 to vector<32x256xf32>
    %34 = arith.mulf %32, %33 : vector<32x256xf32>
    %35 = vector.extract_strided_slice %34 {offsets = [0, 0], sizes = [32, 128], strides = [1, 1]} : vector<32x256xf32> to vector<32x128xf32>
    %c0_26 = arith.constant 0 : index
    %c0_27 = arith.constant 0 : index
    %36 = vector.load %arg10[%c0_26, %c0_27] : memref<2x128xf32, #tpu.memory_space<vmem>>, vector<1x128xf32>
    %37 = vector.broadcast %36 : vector<1x128xf32> to vector<32x128xf32>
    %38 = arith.mulf %35, %37 : vector<32x128xf32>
    %cst_28 = arith.constant dense<0.000000e+00> : vector<32xf32>
    %39 = vector.multi_reduction <add>, %38, %cst_28 [1] : vector<32x128xf32> to vector<32xf32>
    %40 = vector.shape_cast %39 : vector<32xf32> to vector<32x1xf32>
    %41 = vector.extract_strided_slice %34 {offsets = [0, 128], sizes = [32, 128], strides = [1, 1]} : vector<32x256xf32> to vector<32x128xf32>
    %c1 = arith.constant 1 : index
    %c0_29 = arith.constant 0 : index
    %42 = vector.load %arg10[%c1, %c0_29] : memref<2x128xf32, #tpu.memory_space<vmem>>, vector<1x128xf32>
    %43 = vector.broadcast %42 : vector<1x128xf32> to vector<32x128xf32>
    %44 = arith.mulf %41, %43 : vector<32x128xf32>
    %cst_30 = arith.constant dense<0.000000e+00> : vector<32xf32>
    %45 = vector.multi_reduction <add>, %44, %cst_30 [1] : vector<32x128xf32> to vector<32xf32>
    %46 = vector.shape_cast %45 : vector<32xf32> to vector<32x1xf32>
    %c0_31 = arith.constant 0 : index
    %c0_32 = arith.constant 0 : index
    %47 = vector.load %arg11[%c0_31, %c0_32] : memref<1x2xf32, #tpu.memory_space<vmem>>, vector<1x1xf32>
    %48 = vector.broadcast %47 : vector<1x1xf32> to vector<32x1xf32>
    %49 = arith.addf %40, %48 : vector<32x1xf32>
    %c0_33 = arith.constant 0 : index
    %c0_34 = arith.constant 0 : index
    %50 = vector.load %arg12[%c0_33, %c0_34] : memref<32x2xf32, #tpu.memory_space<vmem>>, vector<32x1xf32>
    tpu.vector_store %arg12[%c0_33, %c0_34], %49 {strides = array<i32>} : memref<32x2xf32, #tpu.memory_space<vmem>>, vector<32x1xf32>,
    %c0_35 = arith.constant 0 : index
    %c1_36 = arith.constant 1 : index
    %51 = vector.load %arg11[%c0_35, %c1_36] : memref<1x2xf32, #tpu.memory_space<vmem>>, vector<1x1xf32>
    %52 = vector.broadcast %51 : vector<1x1xf32> to vector<32x1xf32>
    %53 = arith.addf %46, %52 : vector<32x1xf32>
    %c0_37 = arith.constant 0 : index
    %c1_38 = arith.constant 1 : index
    %54 = vector.load %arg12[%c0_37, %c1_38] : memref<32x2xf32, #tpu.memory_space<vmem>>, vector<32x1xf32>
    tpu.vector_store %arg12[%c0_37, %c1_38], %53 {strides = array<i32>} : memref<32x2xf32, #tpu.memory_space<vmem>>, vector<32x1xf32>,
    return
  }
  func.func @transform_0(%arg0: i32) -> (i32, i32) {
    %c0_i32 = arith.constant 0 : i32
    %c0_i32_0 = arith.constant 0 : i32
    return %arg0, %c0_i32 : i32, i32
  }
  func.func @transform_1(%arg0: i32) -> (i32, i32) {
    %c0_i32 = arith.constant 0 : i32
    %c0_i32_0 = arith.constant 0 : i32
    return %arg0, %c0_i32 : i32, i32
  }
  func.func @transform_2(%arg0: i32) -> (i32, i32) {
    %c0_i32 = arith.constant 0 : i32
    %c0_i32_0 = arith.constant 0 : i32
    %c0_i32_1 = arith.constant 0 : i32
    return %c0_i32, %c0_i32_0 : i32, i32
  }
  func.func @transform_3(%arg0: i32) -> (i32, i32) {
    %c0_i32 = arith.constant 0 : i32
    %c0_i32_0 = arith.constant 0 : i32
    %c0_i32_1 = arith.constant 0 : i32
    return %c0_i32, %c0_i32_0 : i32, i32
  }
  func.func @transform_4(%arg0: i32) -> (i32, i32) {
    %c0_i32 = arith.constant 0 : i32
    %c0_i32_0 = arith.constant 0 : i32
    %c0_i32_1 = arith.constant 0 : i32
    return %c0_i32, %c0_i32_0 : i32, i32
  }
  func.func @transform_5(%arg0: i32) -> (i32, i32) {
    %c0_i32 = arith.constant 0 : i32
    %c0_i32_0 = arith.constant 0 : i32
    %c0_i32_1 = arith.constant 0 : i32
    return %c0_i32, %c0_i32_0 : i32, i32
  }
  func.func @transform_6(%arg0: i32) -> (i32, i32) {
    %c0_i32 = arith.constant 0 : i32
    %c0_i32_0 = arith.constant 0 : i32
    %c0_i32_1 = arith.constant 0 : i32
    return %c0_i32, %c0_i32_0 : i32, i32
  }
  func.func @transform_7(%arg0: i32) -> (i32, i32) {
    %c0_i32 = arith.constant 0 : i32
    %c0_i32_0 = arith.constant 0 : i32
    %c0_i32_1 = arith.constant 0 : i32
    return %c0_i32, %c0_i32_0 : i32, i32
  }
  func.func @transform_8(%arg0: i32) -> (i32, i32) {
    %c0_i32 = arith.constant 0 : i32
    %c0_i32_0 = arith.constant 0 : i32
    %c0_i32_1 = arith.constant 0 : i32
    return %c0_i32, %c0_i32_0 : i32, i32
  }
  func.func @transform_9(%arg0: i32) -> (i32, i32) {
    %c0_i32 = arith.constant 0 : i32
    %c0_i32_0 = arith.constant 0 : i32
    %c0_i32_1 = arith.constant 0 : i32
    return %c0_i32, %c0_i32_0 : i32, i32
  }
  func.func @transform_10(%arg0: i32) -> (i32, i32) {
    %c0_i32 = arith.constant 0 : i32
    %c0_i32_0 = arith.constant 0 : i32
    %c0_i32_1 = arith.constant 0 : i32
    return %c0_i32, %c0_i32_0 : i32, i32
  }
  func.func @transform_11(%arg0: i32) -> (i32, i32) {
    %c0_i32 = arith.constant 0 : i32
    %c0_i32_0 = arith.constant 0 : i32
    return %arg0, %c0_i32 : i32, i32
  }
}

</mosaic_0001>

<llo_original>
// kernel: tpu_custom_call.1
$region0: #{tpu_custom_call.1}
  #allocation0 [shape = 'u32[]', space=smem, size = 0x4, offset = 0x4, fixed_abs, tag = 'smem constant byte address 0x4 - core index']
  #allocation1 [shape = 'u32[144,128]{1,0:T(1,128)}', space=vmem, size = 0x12000, scoped, tag = 'internal scratch']
  %s0 = inlined_call_operand.vmem [shape: f32[64,12], index: 0, kind: input, shape index: {}]
  %s1 = inlined_call_operand.vmem [shape: f32[64,4], index: 1, kind: input, shape index: {}]
  %s2 = inlined_call_operand.vmem [shape: f32[12,128], index: 2, kind: input, shape index: {}]
  %s3 = inlined_call_operand.vmem [shape: f32[4,128], index: 3, kind: input, shape index: {}]
  %s4 = inlined_call_operand.vmem [shape: f32[1,128], index: 4, kind: input, shape index: {}]
  %s5 = inlined_call_operand.hbm [shape: bf16[128,128], index: 5, kind: input, shape index: {}]
  %s6 = inlined_call_operand.vmem [shape: f32[1,128], index: 6, kind: input, shape index: {}]
  %s7 = inlined_call_operand.vmem [shape: bf16[128,256], index: 7, kind: input, shape index: {}]
  %s8 = inlined_call_operand.vmem [shape: f32[1,256], index: 8, kind: input, shape index: {}]
  %s9 = inlined_call_operand.vmem [shape: f32[2,128], index: 9, kind: input, shape index: {}]
  %s10 = inlined_call_operand.vmem [shape: f32[1,2], index: 10, kind: input, shape index: {}]
  %s11 = inlined_call_operand.vmem [shape: f32[64,2], index: 11, kind: output, shape index: {}]
  %s12 = sld [smem:[#allocation0]]
  $region81: #{tpu_custom_call.1} parent=0
    _
  %s14 = ssub.s32 1, %s12
  %s15 = scalar_select 0, %s14, %s12
  $region1: #{tpu_custom_call.1} parent=0
    #allocation2 [shape = 'u8[32768]{0}', space=vmem, size = 0x8000, scoped, tag = 'input window, operand 5, single buffered']
    #allocation3 [shape = 's32[2]{0}', space=sflag, size = 0x8, scoped, tag = 'scoped memory for tpu_custom_call.1']
    %16 = vsyncpa [#allocation3], 0
    loop: start=0, step=1, limit=4
    $region2: #{tpu_custom_call.1} parent=1 // loop_pre_header
      _
    $region3: #{tpu_custom_call.1} parent=1 // loop_header
      %s18 = sphi 0, %s22
      %p19 = scmp.ge.s32.totalorder %s18, 4
      %s28 = sphi 0, %s30
      %s31 = sphi 0, %s28
      %s32 = sphi 0, %s31
      %s48 = sphi 0, %s32
      %s54 = sphi 0, %s56
      %s57 = sphi 0, %s54
      %s58 = sphi 0, %s57
      %s74 = sphi 0, %s58
      %s78 = sphi 0, %s78
      %s80 = sphi 0, %s78
      %s81 = sphi 0, %s80
      %s95 = sphi 0, %s81
      %s99 = sphi 0, %s99
      %s101 = sphi 0, %s99
      %s102 = sphi 0, %s101
      %s116 = sphi 0, %s102
      %s120 = sphi 0, %s120
      %s122 = sphi 0, %s120
      %s123 = sphi 0, %s122
      %s137 = sphi 0, %s123
      %s141 = sphi 0, %s141
      %s143 = sphi 0, %s141
      %s144 = sphi 0, %s143
      %s158 = sphi 0, %s144
      %s162 = sphi 0, %s162
      %s164 = sphi 0, %s162
      %s165 = sphi 0, %s164
      %s179 = sphi 0, %s165
      %s183 = sphi 0, %s183
      %s185 = sphi 0, %s183
      %s186 = sphi 0, %s185
      %s200 = sphi 0, %s186
      %s204 = sphi 0, %s204
      %s206 = sphi 0, %s204
      %s207 = sphi 0, %s206
      %s221 = sphi 0, %s207
      %s225 = sphi 0, %s225
      %s227 = sphi 0, %s225
      %s228 = sphi 0, %s227
      %s242 = sphi 0, %s228
      %s246 = sphi 0, %s246
      %s248 = sphi 0, %s246
      %s249 = sphi 0, %s248
      %s263 = sphi 0, %s249
      %s269 = sphi 0, %s271
      %s272 = sphi 0, %s269
      %s273 = sphi 0, %s272
      %s289 = sphi 0, %s273
    $region4: #{tpu_custom_call.1} parent=1 // loop_header_branch
      %21 = sbr.rel (%p19) target = $region8
    $region5: #{tpu_custom_call.1} parent=1 // loop_body
      %s23 = ssub.s32 %s18, 1
      %s24 = ssub.s32 %s18, 2
      %s25 = sadd.s32 %s18, 1
      %s26 = ssub.s32 %s18, %s25
      %p27 = scmp.eq.s32.totalorder %s26, 0
      %s29 = sadd.s32 %s28, 1
      %s30 = scalar_select %p27, %s28, %s29
      %p33 = pneg %p27
      %p34 = scmp.eq.s32.totalorder %s18, 1
      %p35 = por %p33, %p34
      %p36 = scmp.ne.s32.totalorder %s28, %s31
      %p37 = scmp.eq.s32.totalorder %s18, 0
      %p38 = por %p36, %p37
      %p39 = scmp.ne.s32.totalorder %s28, %s31
      %p40 = scmp.eq.s32.totalorder %s23, 1
      %p41 = por %p39, %p40
      %p42 = scmp.ne.s32.totalorder %s31, %s32
      %p43 = scmp.eq.s32.totalorder %s23, 0
      %p44 = por %p42, %p43
      %p45 = scmp.ne.s32.totalorder %s31, %s32
      %p46 = scmp.eq.s32.totalorder %s24, 1
      %p47 = por %p45, %p46
      %p49 = scmp.ne.s32.totalorder %s32, %s48
      %p50 = scmp.eq.s32.totalorder %s24, 0
      %p51 = por %p49, %p50
      %s52 = ssub.s32 %s18, %s25
      %p53 = scmp.eq.s32.totalorder %s52, 0
      %s55 = sadd.s32 %s54, 1
      %s56 = scalar_select %p53, %s54, %s55
      %p59 = pneg %p53
      %p60 = scmp.eq.s32.totalorder %s18, 1
      %p61 = por %p59, %p60
      %p62 = scmp.ne.s32.totalorder %s54, %s57
      %p63 = scmp.eq.s32.totalorder %s18, 0
      %p64 = por %p62, %p63
      %p65 = scmp.ne.s32.totalorder %s54, %s57
      %p66 = scmp.eq.s32.totalorder %s23, 1
      %p67 = por %p65, %p66
      %p68 = scmp.ne.s32.totalorder %s57, %s58
      %p69 = scmp.eq.s32.totalorder %s23, 0
      %p70 = por %p68, %p69
      %p71 = scmp.ne.s32.totalorder %s57, %s58
      %p72 = scmp.eq.s32.totalorder %s24, 1
      %p73 = por %p71, %p72
      %p75 = scmp.ne.s32.totalorder %s58, %s74
      %p76 = scmp.eq.s32.totalorder %s24, 0
      %p77 = por %p75, %p76
      %s79 = sadd.s32 %s78, 1
      %p82 = scmp.eq.s32.totalorder %s18, 1
      %p83 = scmp.ne.s32.totalorder %s78, %s80
      %p84 = scmp.eq.s32.totalorder %s18, 0
      %p85 = por %p83, %p84
      %p86 = scmp.ne.s32.totalorder %s78, %s80
      %p87 = scmp.eq.s32.totalorder %s23, 1
      %p88 = por %p86, %p87
      %p89 = scmp.ne.s32.totalorder %s80, %s81
      %p90 = scmp.eq.s32.totalorder %s23, 0
      %p91 = por %p89, %p90
      %p92 = scmp.ne.s32.totalorder %s80, %s81
      %p93 = scmp.eq.s32.totalorder %s24, 1
      %p94 = por %p92, %p93
      %p96 = scmp.ne.s32.totalorder %s81, %s95
      %p97 = scmp.eq.s32.totalorder %s24, 0
      %p98 = por %p96, %p97
      %s100 = sadd.s32 %s99, 1
      %p103 = scmp.eq.s32.totalorder %s18, 1
      %p104 = scmp.ne.s32.totalorder %s99, %s101
      %p105 = scmp.eq.s32.totalorder %s18, 0
      %p106 = por %p104, %p105
      %p107 = scmp.ne.s32.totalorder %s99, %s101
      %p108 = scmp.eq.s32.totalorder %s23, 1
      %p109 = por %p107, %p108
      %p110 = scmp.ne.s32.totalorder %s101, %s102
      %p111 = scmp.eq.s32.totalorder %s23, 0
      %p112 = por %p110, %p111
      %p113 = scmp.ne.s32.totalorder %s101, %s102
      %p114 = scmp.eq.s32.totalorder %s24, 1
      %p115 = por %p113, %p114
      %p117 = scmp.ne.s32.totalorder %s102, %s116
      %p118 = scmp.eq.s32.totalorder %s24, 0
      %p119 = por %p117, %p118
      %s121 = sadd.s32 %s120, 1
      %p124 = scmp.eq.s32.totalorder %s18, 1
      %p125 = scmp.ne.s32.totalorder %s120, %s122
      %p126 = scmp.eq.s32.totalorder %s18, 0
      %p127 = por %p125, %p126
      %p128 = scmp.ne.s32.totalorder %s120, %s122
      %p129 = scmp.eq.s32.totalorder %s23, 1
      %p130 = por %p128, %p129
      %p131 = scmp.ne.s32.totalorder %s122, %s123
      %p132 = scmp.eq.s32.totalorder %s23, 0
      %p133 = por %p131, %p132
      %p134 = scmp.ne.s32.totalorder %s122, %s123
      %p135 = scmp.eq.s32.totalorder %s24, 1
      %p136 = por %p134, %p135
      %p138 = scmp.ne.s32.totalorder %s123, %s137
      %p139 = scmp.eq.s32.totalorder %s24, 0
      %p140 = por %p138, %p139
      %s142 = sadd.s32 %s141, 1
      %p145 = scmp.eq.s32.totalorder %s18, 1
      %p146 = scmp.ne.s32.totalorder %s141, %s143
      %p147 = scmp.eq.s32.totalorder %s18, 0
      %p148 = por %p146, %p147
      %p149 = scmp.ne.s32.totalorder %s141, %s143
      %p150 = scmp.eq.s32.totalorder %s23, 1
      %p151 = por %p149, %p150
      %p152 = scmp.ne.s32.totalorder %s143, %s144
      %p153 = scmp.eq.s32.totalorder %s23, 0
      %p154 = por %p152, %p153
      %p155 = scmp.ne.s32.totalorder %s143, %s144
      %p156 = scmp.eq.s32.totalorder %s24, 1
      %p157 = por %p155, %p156
      %p159 = scmp.ne.s32.totalorder %s144, %s158
      %p160 = scmp.eq.s32.totalorder %s24, 0
      %p161 = por %p159, %p160
      %s163 = sadd.s32 %s162, 1
      %p166 = scmp.eq.s32.totalorder %s18, 1
      %p167 = scmp.ne.s32.totalorder %s162, %s164
      %p168 = scmp.eq.s32.totalorder %s18, 0
      %p169 = por %p167, %p168
      %p170 = scmp.ne.s32.totalorder %s162, %s164
      %p171 = scmp.eq.s32.totalorder %s23, 1
      %p172 = por %p170, %p171
      %p173 = scmp.ne.s32.totalorder %s164, %s165
      %p174 = scmp.eq.s32.totalorder %s23, 0
      %p175 = por %p173, %p174
      %p176 = scmp.ne.s32.totalorder %s164, %s165
      %p177 = scmp.eq.s32.totalorder %s24, 1
      %p178 = por %p176, %p177
      %p180 = scmp.ne.s32.totalorder %s165, %s179
      %p181 = scmp.eq.s32.totalorder %s24, 0
      %p182 = por %p180, %p181
      %s184 = sadd.s32 %s183, 1
      %p187 = scmp.eq.s32.totalorder %s18, 1
      %p188 = scmp.ne.s32.totalorder %s183, %s185
      %p189 = scmp.eq.s32.totalorder %s18, 0
      %p190 = por %p188, %p189
      %p191 = scmp.ne.s32.totalorder %s183, %s185
      %p192 = scmp.eq.s32.totalorder %s23, 1
      %p193 = por %p191, %p192
      %p194 = scmp.ne.s32.totalorder %s185, %s186
      %p195 = scmp.eq.s32.totalorder %s23, 0
      %p196 = por %p194, %p195
      %p197 = scmp.ne.s32.totalorder %s185, %s186
      %p198 = scmp.eq.s32.totalorder %s24, 1
      %p199 = por %p197, %p198
      %p201 = scmp.ne.s32.totalorder %s186, %s200
      %p202 = scmp.eq.s32.totalorder %s24, 0
      %p203 = por %p201, %p202
      %s205 = sadd.s32 %s204, 1
      %p208 = scmp.eq.s32.totalorder %s18, 1
      %p209 = scmp.ne.s32.totalorder %s204, %s206
      %p210 = scmp.eq.s32.totalorder %s18, 0
      %p211 = por %p209, %p210
      %p212 = scmp.ne.s32.totalorder %s204, %s206
      %p213 = scmp.eq.s32.totalorder %s23, 1
      %p214 = por %p212, %p213
      %p215 = scmp.ne.s32.totalorder %s206, %s207
      %p216 = scmp.eq.s32.totalorder %s23, 0
      %p217 = por %p215, %p216
      %p218 = scmp.ne.s32.totalorder %s206, %s207
      %p219 = scmp.eq.s32.totalorder %s24, 1
      %p220 = por %p218, %p219
      %p222 = scmp.ne.s32.totalorder %s207, %s221
      %p223 = scmp.eq.s32.totalorder %s24, 0
      %p224 = por %p222, %p223
      %s226 = sadd.s32 %s225, 1
      %p229 = scmp.eq.s32.totalorder %s18, 1
      %p230 = scmp.ne.s32.totalorder %s225, %s227
      %p231 = scmp.eq.s32.totalorder %s18, 0
      %p232 = por %p230, %p231
      %p233 = scmp.ne.s32.totalorder %s225, %s227
      %p234 = scmp.eq.s32.totalorder %s23, 1
      %p235 = por %p233, %p234
      %p236 = scmp.ne.s32.totalorder %s227, %s228
      %p237 = scmp.eq.s32.totalorder %s23, 0
      %p238 = por %p236, %p237
      %p239 = scmp.ne.s32.totalorder %s227, %s228
      %p240 = scmp.eq.s32.totalorder %s24, 1
      %p241 = por %p239, %p240
      %p243 = scmp.ne.s32.totalorder %s228, %s242
      %p244 = scmp.eq.s32.totalorder %s24, 0
      %p245 = por %p243, %p244
      %s247 = sadd.s32 %s246, 1
      %p250 = scmp.eq.s32.totalorder %s18, 1
      %p251 = scmp.ne.s32.totalorder %s246, %s248
      %p252 = scmp.eq.s32.totalorder %s18, 0
      %p253 = por %p251, %p252
      %p254 = scmp.ne.s32.totalorder %s246, %s248
      %p255 = scmp.eq.s32.totalorder %s23, 1
      %p256 = por %p254, %p255
      %p257 = scmp.ne.s32.totalorder %s248, %s249
      %p258 = scmp.eq.s32.totalorder %s23, 0
      %p259 = por %p257, %p258
      %p260 = scmp.ne.s32.totalorder %s248, %s249
      %p261 = scmp.eq.s32.totalorder %s24, 1
      %p262 = por %p260, %p261
      %p264 = scmp.ne.s32.totalorder %s249, %s263
      %p265 = scmp.eq.s32.totalorder %s24, 0
      %p266 = por %p264, %p265
      %s267 = ssub.s32 %s18, %s25
      %p268 = scmp.eq.s32.totalorder %s267, 0
      %s270 = sadd.s32 %s269, 1
      %s271 = scalar_select %p268, %s269, %s270
      %p274 = pneg %p268
      %p275 = scmp.eq.s32.totalorder %s18, 1
      %p276 = por %p274, %p275
      %p277 = scmp.ne.s32.totalorder %s269, %s272
      %p278 = scmp.eq.s32.totalorder %s18, 0
      %p279 = por %p277, %p278
      %p280 = scmp.ne.s32.totalorder %s269, %s272
      %p281 = scmp.eq.s32.totalorder %s23, 1
      %p282 = por %p280, %p281
      %p283 = scmp.ne.s32.totalorder %s272, %s273
      %p284 = scmp.eq.s32.totalorder %s23, 0
      %p285 = por %p283, %p284
      %p286 = scmp.ne.s32.totalorder %s272, %s273
      %p287 = scmp.eq.s32.totalorder %s24, 1
      %p288 = por %p286, %p287
      %p290 = scmp.ne.s32.totalorder %s273, %s289
      %p291 = scmp.eq.s32.totalorder %s24, 0
      %p292 = por %p290, %p291
      %p293 = scmp.le.s32.totalorder 1, %s18
      %p294 = scmp.lt.s32.totalorder %s18, 3
      %p295 = pnand %p293, %p294
      %p296 = pneg %p295
      // Predicated region
      $region9: #{tpu_custom_call.1} parent=5 // pred_check
        _
      $region10: #{tpu_custom_call.1} parent=5 // pred_check_branch
        %298 = sbr.rel (%p295) target = $region12
      $region11: #{tpu_custom_call.1} parent=5 // pred_region
        %s299 = ssub.s32 %s18, 1
        // Predicated region
        $region13: #{tpu_custom_call.1} parent=11 // pred_check
          %p300 = pneg %p91
        $region14: #{tpu_custom_call.1} parent=11 // pred_check_branch
          %302 = sbr.rel (%p300) target = $region16
        $region15: #{tpu_custom_call.1} parent=11 // pred_region
          _
        $region16: #{tpu_custom_call.1} parent=11 // pred_fallthru
          _
        // Predicated region
        $region17: #{tpu_custom_call.1} parent=11 // pred_check
          %p303 = pneg %p112
        $region18: #{tpu_custom_call.1} parent=11 // pred_check_branch
          %305 = sbr.rel (%p303) target = $region20
        $region19: #{tpu_custom_call.1} parent=11 // pred_region
          _
        $region20: #{tpu_custom_call.1} parent=11 // pred_fallthru
          _
        // Predicated region
        $region21: #{tpu_custom_call.1} parent=11 // pred_check
          %p306 = pneg %p133
        $region22: #{tpu_custom_call.1} parent=11 // pred_check_branch
          %308 = sbr.rel (%p306) target = $region24
        $region23: #{tpu_custom_call.1} parent=11 // pred_region
          _
        $region24: #{tpu_custom_call.1} parent=11 // pred_fallthru
          _
        // Predicated region
        $region25: #{tpu_custom_call.1} parent=11 // pred_check
          %p309 = pneg %p154
        $region26: #{tpu_custom_call.1} parent=11 // pred_check_branch
          %311 = sbr.rel (%p309) target = $region28
        $region27: #{tpu_custom_call.1} parent=11 // pred_region
          %s313 = ssub.s32 1024, 1024
          %314 = vsyncadd [#allocation3], %s313
          %s315 = sshll.u32 [#allocation2], 4
          %s316 = int_to_ptr.vmem [resolvable:$true] %s315
          %321 = dma.hbm_to_vmem [thread:$0]  %s5, 1024, %s316, [#allocation3], 64, 64, 4
        $region28: #{tpu_custom_call.1} parent=11 // pred_fallthru
          _
        // Predicated region
        $region29: #{tpu_custom_call.1} parent=11 // pred_check
          %p322 = pneg %p175
        $region30: #{tpu_custom_call.1} parent=11 // pred_check_branch
          %324 = sbr.rel (%p322) target = $region32
        $region31: #{tpu_custom_call.1} parent=11 // pred_region
          _
        $region32: #{tpu_custom_call.1} parent=11 // pred_fallthru
          _
        // Predicated region
        $region33: #{tpu_custom_call.1} parent=11 // pred_check
          %p325 = pneg %p196
        $region34: #{tpu_custom_call.1} parent=11 // pred_check_branch
          %327 = sbr.rel (%p325) target = $region36
        $region35: #{tpu_custom_call.1} parent=11 // pred_region
          _
        $region36: #{tpu_custom_call.1} parent=11 // pred_fallthru
          _
        // Predicated region
        $region37: #{tpu_custom_call.1} parent=11 // pred_check
          %p328 = pneg %p217
        $region38: #{tpu_custom_call.1} parent=11 // pred_check_branch
          %330 = sbr.rel (%p328) target = $region40
        $region39: #{tpu_custom_call.1} parent=11 // pred_region
          _
        $region40: #{tpu_custom_call.1} parent=11 // pred_fallthru
          _
        // Predicated region
        $region41: #{tpu_custom_call.1} parent=11 // pred_check
          %p331 = pneg %p238
        $region42: #{tpu_custom_call.1} parent=11 // pred_check_branch
          %333 = sbr.rel (%p331) target = $region44
        $region43: #{tpu_custom_call.1} parent=11 // pred_region
          _
        $region44: #{tpu_custom_call.1} parent=11 // pred_fallthru
          _
        // Predicated region
        $region45: #{tpu_custom_call.1} parent=11 // pred_check
          %p334 = pneg %p259
        $region46: #{tpu_custom_call.1} parent=11 // pred_check_branch
          %336 = sbr.rel (%p334) target = $region48
        $region47: #{tpu_custom_call.1} parent=11 // pred_region
          _
        $region48: #{tpu_custom_call.1} parent=11 // pred_fallthru
          _
      $region12: #{tpu_custom_call.1} parent=5 // pred_fallthru
        _
      %p337 = scmp.lt.s32.totalorder %s18, 2
      // Predicated region
      $region49: #{tpu_custom_call.1} parent=5 // pred_check
        %p338 = pneg %p337
      $region50: #{tpu_custom_call.1} parent=5 // pred_check_branch
        %340 = sbr.rel (%p338) target = $region52
      $region51: #{tpu_custom_call.1} parent=5 // pred_region
        // Predicated region
        $region53: #{tpu_custom_call.1} parent=51 // pred_check
          %p341 = pneg %p38
        $region54: #{tpu_custom_call.1} parent=51 // pred_check_branch
          %343 = sbr.rel (%p341) target = $region56
        $region55: #{tpu_custom_call.1} parent=51 // pred_region
          %s344 = smul.u32 4, %s18
          %p345 = scmp.lt.s32.totalorder %s344, 7
          %s346 = scalar_select %p345, %s344, 7
          %s347 = smul.addr %s346, 8
          %s348 = scalar_lea.vmem %s0, %s347
          %s349 = smul.u32 4, %s18
        $region56: #{tpu_custom_call.1} parent=51 // pred_fallthru
          _
        // Predicated region
        $region57: #{tpu_custom_call.1} parent=51 // pred_check
          %p350 = pneg %p64
        $region58: #{tpu_custom_call.1} parent=51 // pred_check_branch
          %352 = sbr.rel (%p350) target = $region60
        $region59: #{tpu_custom_call.1} parent=51 // pred_region
          %s353 = smul.u32 4, %s18
          %p354 = scmp.lt.s32.totalorder %s353, 7
          %s355 = scalar_select %p354, %s353, 7
          %s356 = smul.addr %s355, 8
          %s357 = scalar_lea.vmem %s1, %s356
          %s358 = smul.u32 4, %s18
        $region60: #{tpu_custom_call.1} parent=51 // pred_fallthru
          _
      $region52: #{tpu_custom_call.1} parent=5 // pred_fallthru
        _
      %p359 = scmp.le.s32.totalorder 1, %s18
      %p360 = scmp.lt.s32.totalorder %s18, 3
      %p361 = pnand %p359, %p360
      %p362 = pneg %p361
      // Predicated region
      $region61: #{tpu_custom_call.1} parent=5 // pred_check
        _
      $region62: #{tpu_custom_call.1} parent=5 // pred_check_branch
        %364 = sbr.rel (%p361) target = $region64
      $region63: #{tpu_custom_call.1} parent=5 // pred_region
        %s365 = ssub.s32 %s18, 1
        // Predicated region
        $region65: #{tpu_custom_call.1} parent=63 // pred_check
          %p366 = pneg %p154
        $region66: #{tpu_custom_call.1} parent=63 // pred_check_branch
          %368 = sbr.rel (%p366) target = $region68
        $region67: #{tpu_custom_call.1} parent=63 // pred_region
          %369 = dma.done [#allocation3], 1024
        $region68: #{tpu_custom_call.1} parent=63 // pred_fallthru
          _
        %s370 = smul.u32 4, %s23
        %p371 = scmp.lt.s32.totalorder %s370, 7
        %s372 = scalar_select %p371, %s370, 7
        %s373 = smul.addr %s372, 8
        %s374 = scalar_lea.vmem %s0, %s373
        %p375 = pneg %p44
        %p376 = pneg %p41
        %s377 = smul.u32 4, %s23
        %p378 = scmp.lt.s32.totalorder %s377, 7
        %s379 = scalar_select %p378, %s377, 7
        %s380 = smul.addr %s379, 8
        %s381 = scalar_lea.vmem %s1, %s380
        %p382 = pneg %p70
        %p383 = pneg %p67
        %p384 = pneg %p91
        %p385 = pneg %p88
        %p386 = pneg %p112
        %p387 = pneg %p109
        %p388 = pneg %p133
        %p389 = pneg %p130
        %p390 = pneg %p154
        %p391 = pneg %p151
        %p392 = pneg %p175
        %p393 = pneg %p172
        %p394 = pneg %p196
        %p395 = pneg %p193
        %p396 = pneg %p217
        %p397 = pneg %p214
        %p398 = pneg %p238
        %p399 = pneg %p235
        %p400 = pneg %p259
        %p401 = pneg %p256
        %p402 = pneg %p285
        %p403 = pneg %p282
        %s404 = smul.u32 4, %s23
        %p405 = scmp.lt.s32.totalorder %s404, 7
        %s406 = scalar_select %p405, %s404, 7
        %s407 = smul.addr %s406, 8
        %s408 = scalar_lea.vmem %s11, %s407
        %s409 = smul.u32 4, %s23
        %p410 = scmp.lt.s32.totalorder %s409, 7
        %s411 = scalar_select %p410, %s409, 7
        %s412 = smul.addr %s411, 8
        %s413 = scalar_lea.vmem %s0, %s412
        %s414 = smul.u32 4, %s23
        %s415 = smul.u32 4, %s23
        %p416 = scmp.lt.s32.totalorder %s415, 7
        %s417 = scalar_select %p416, %s415, 7
        %s418 = smul.addr %s417, 8
        %s419 = scalar_lea.vmem %s1, %s418
        %s420 = smul.u32 4, %s23
        %s421 = smul.u32 4, %s23
        %p422 = scmp.lt.s32.totalorder %s421, 7
        %s423 = scalar_select %p422, %s421, 7
        %s424 = smul.addr %s423, 8
        %s425 = scalar_lea.vmem %s11, %s424
        %s426 = smul.u32 4, %s23
        %v428 = vld [vmem:[%s413] sm:$0xff]
        %v429 = vld [vmem:[%s413 + $0x8] sm:$0xff]
        %v430 = vld [vmem:[%s413 + $0x10] sm:$0xff]
        %v431 = vld [vmem:[%s413 + $0x18] sm:$0xff]
        %v432 = vld [vmem:[%s419] sm:$0xff]
        %v433 = vld [vmem:[%s419 + $0x8] sm:$0xff]
        %v434 = vld [vmem:[%s419 + $0x10] sm:$0xff]
        %v435 = vld [vmem:[%s419 + $0x18] sm:$0xff]
        %v436 = vld [vmem:[%s2] sm:$0xff]
        %v437 = vld [vmem:[%s2 + $0x8] sm:$0xf]
        %v438 = vld [vmem:[%s3] sm:$0xf]
        %vm439 = vcmask 31744
        %v441 = vsel %vm439, %v432, 0
        %v444 = vsel %vm439, %v433, 0
        %v447 = vsel %vm439, %v434, 0
        %v450 = vsel %vm439, %v435, 0
        %vm452 = vcmask 1043456
        %v454 = vsel %vm452, %v438, 0
        %456 = vmatprep.subr.mxu0 0.0
        %457 = vmatpush1.msra.mxu0 0.0
        %458 = vmatprep.subr.mxu0 0.0
        %459 = vmatpush1.msra.mxu0 0.0
        %460 = vmatprep.subr.mxu0 0.0
        %461 = vmatpush1.msra.mxu0 0.0
        %462 = vmatprep.subr.mxu0 0.0
        %463 = vmatpush1.msra.mxu0 0.0
        %464 = vmatprep.subr.mxu0 0.0
        %465 = vmatpush1.msra.mxu0 0.0
        %466 = vmatprep.subr.mxu0 0.0
        %467 = vmatpush1.msra.mxu0 0.0
        %468 = vmatprep.subr.mxu0 0.0
        %469 = vmatpush1.msra.mxu0 0.0
        %470 = vmatprep.subr.mxu0 0.0
        %471 = vmatpush1.msra.mxu0 0.0
        %472 = vmatprep.subr.mxu0 0.0
        %473 = vmatpush1.msra.mxu0 0.0
        %474 = vmatprep.subr.mxu0 0.0
        %475 = vmatpush1.msra.mxu0 0.0
        %476 = vmatprep.subr.mxu0 0.0
        %477 = vmatpush1.msra.mxu0 0.0
        %478 = vmatprep.subr.mxu0 0.0
        %479 = vmatpush1.msra.mxu0 0.0
        %480 = vmatprep.subr.mxu0 0.0
        %481 = vmatpush1.msra.mxu0 0.0
        %482 = vmatprep.subr.mxu0 0.0
        %483 = vmatpush1.msra.mxu0 0.0
        %484 = vmatprep.subr.mxu0 0.0
        %485 = vmatpush1.msra.mxu0 0.0
        %486 = vmatprep.subr.mxu0 0.0
        %487 = vmatpush1.msra.mxu0 %v454
        %488 = vmatprep.subr.mxu0 0.0
        %489 = vmatpush2.msra.mxu0 0.0
        %490 = vmatprep.subr.mxu0 0.0
        %491 = vmatpush2.msra.mxu0 0.0
        %492 = vmatprep.subr.mxu0 0.0
        %493 = vmatpush2.msra.mxu0 0.0
        %494 = vmatprep.subr.mxu0 0.0
        %495 = vmatpush2.msra.mxu0 0.0
        %496 = vmatprep.subr.mxu0 0.0
        %497 = vmatpush2.msra.mxu0 0.0
        %498 = vmatprep.subr.mxu0 0.0
        %499 = vmatpush2.msra.mxu0 0.0
        %500 = vmatprep.subr.mxu0 0.0
        %501 = vmatpush2.msra.mxu0 0.0
        %502 = vmatprep.subr.mxu0 0.0
        %503 = vmatpush2.msra.mxu0 0.0
        %504 = vmatprep.subr.mxu0 0.0
        %505 = vmatpush2.msra.mxu0 0.0
        %506 = vmatprep.subr.mxu0 0.0
        %507 = vmatpush2.msra.mxu0 0.0
        %508 = vmatprep.subr.mxu0 0.0
        %509 = vmatpush2.msra.mxu0 0.0
        %510 = vmatprep.subr.mxu0 0.0
        %511 = vmatpush2.msra.mxu0 0.0
        %512 = vmatprep.subr.mxu0 0.0
        %513 = vmatpush2.msra.mxu0 0.0
        %514 = vmatprep.subr.mxu0 0.0
        %515 = vmatpush2.msra.mxu0 0.0
        %516 = vmatprep.subr.mxu0 0.0
        %517 = vmatpush2.msra.mxu0 0.0
        %518 = vmatprep.subr.mxu0 0.0
        %519 = vmatpush2.msra.mxu0 0.0
        %520 = vmatprep.mubr.f32.mxu0 0.0
        %521 = vmatmul.mubr.f32.gmra.mxu0 %v441
        %v522 = vpop.f32.mrf.mxu0
        %v523 = vadd.f32 0.0, %v522
        %v524 = vpop.f32.mrf.mxu0
        %525 = vmatprep.mubr.f32.mxu0 0.0
        %526 = vmatmul.mubr.f32.gmra.mxu0 %v444
        %v527 = vpop.f32.mrf.mxu0
        %v528 = vadd.f32 0.0, %v527
        %v529 = vpop.f32.mrf.mxu0
        %530 = vmatprep.mubr.f32.mxu0 0.0
        %531 = vmatmul.mubr.f32.gmra.mxu0 %v447
        %v532 = vpop.f32.mrf.mxu0
        %v533 = vadd.f32 0.0, %v532
        %v534 = vpop.f32.mrf.mxu0
        %535 = vmatprep.mubr.f32.mxu0 0.0
        %536 = vmatmul.mubr.f32.gmra.mxu0 %v450
        %v537 = vpop.f32.mrf.mxu0
        %v538 = vadd.f32 0.0, %v537
        %v539 = vpop.f32.mrf.mxu0
        %540 = vdwg.mxu0
        %vm541 = vcmask 97280
        %v543 = vsel %vm541, %v428, 0
        %v546 = vsel %vm541, %v429, 0
        %v549 = vsel %vm541, %v430, 0
        %v552 = vsel %vm541, %v431, 0
        %v555 = vsel %vm452, %v437, 0
        %557 = vmatprep.subr.mxu0 0.0
        %558 = vmatpush1.msra.mxu0 0.0
        %559 = vmatprep.subr.mxu0 0.0
        %560 = vmatpush1.msra.mxu0 0.0
        %561 = vmatprep.subr.mxu0 0.0
        %562 = vmatpush1.msra.mxu0 0.0
        %563 = vmatprep.subr.mxu0 0.0
        %564 = vmatpush1.msra.mxu0 0.0
        %565 = vmatprep.subr.mxu0 0.0
        %566 = vmatpush1.msra.mxu0 0.0
        %567 = vmatprep.subr.mxu0 0.0
        %568 = vmatpush1.msra.mxu0 0.0
        %569 = vmatprep.subr.mxu0 0.0
        %570 = vmatpush1.msra.mxu0 0.0
        %571 = vmatprep.subr.mxu0 0.0
        %572 = vmatpush1.msra.mxu0 0.0
        %573 = vmatprep.subr.mxu0 0.0
        %574 = vmatpush1.msra.mxu0 0.0
        %575 = vmatprep.subr.mxu0 0.0
        %576 = vmatpush1.msra.mxu0 0.0
        %577 = vmatprep.subr.mxu0 0.0
        %578 = vmatpush1.msra.mxu0 0.0
        %579 = vmatprep.subr.mxu0 0.0
        %580 = vmatpush1.msra.mxu0 0.0
        %581 = vmatprep.subr.mxu0 0.0
        %582 = vmatpush1.msra.mxu0 0.0
        %583 = vmatprep.subr.mxu0 0.0
        %584 = vmatpush1.msra.mxu0 0.0
        %585 = vmatprep.subr.mxu0 0.0
        %586 = vmatpush1.msra.mxu0 %v555
        %587 = vmatprep.subr.mxu0 0.0
        %588 = vmatpush1.msra.mxu0 %v436
        %589 = vmatprep.subr.mxu0 0.0
        %590 = vmatpush2.msra.mxu0 0.0
        %591 = vmatprep.subr.mxu0 0.0
        %592 = vmatpush2.msra.mxu0 0.0
        %593 = vmatprep.subr.mxu0 0.0
        %594 = vmatpush2.msra.mxu0 0.0
        %595 = vmatprep.subr.mxu0 0.0
        %596 = vmatpush2.msra.mxu0 0.0
        %597 = vmatprep.subr.mxu0 0.0
        %598 = vmatpush2.msra.mxu0 0.0
        %599 = vmatprep.subr.mxu0 0.0
        %600 = vmatpush2.msra.mxu0 0.0
        %601 = vmatprep.subr.mxu0 0.0
        %602 = vmatpush2.msra.mxu0 0.0
        %603 = vmatprep.subr.mxu0 0.0
        %604 = vmatpush2.msra.mxu0 0.0
        %605 = vmatprep.subr.mxu0 0.0
        %606 = vmatpush2.msra.mxu0 0.0
        %607 = vmatprep.subr.mxu0 0.0
        %608 = vmatpush2.msra.mxu0 0.0
        %609 = vmatprep.subr.mxu0 0.0
        %610 = vmatpush2.msra.mxu0 0.0
        %611 = vmatprep.subr.mxu0 0.0
        %612 = vmatpush2.msra.mxu0 0.0
        %613 = vmatprep.subr.mxu0 0.0
        %614 = vmatpush2.msra.mxu0 0.0
        %615 = vmatprep.subr.mxu0 0.0
        %616 = vmatpush2.msra.mxu0 0.0
        %617 = vmatprep.subr.mxu0 0.0
        %618 = vmatpush2.msra.mxu0 0.0
        %619 = vmatprep.subr.mxu0 0.0
        %620 = vmatpush2.msra.mxu0 0.0
        %621 = vmatprep.mubr.f32.mxu0 0.0
        %622 = vmatmul.mubr.f32.gmra.mxu0 %v543
        %v623 = vpop.f32.mrf.mxu0
        %v624 = vadd.f32 %v523, %v623
        %v625 = vpop.f32.mrf.mxu0
        %626 = vmatprep.mubr.f32.mxu0 0.0
        %627 = vmatmul.mubr.f32.gmra.mxu0 %v546
        %v628 = vpop.f32.mrf.mxu0
        %v629 = vadd.f32 %v528, %v628
        %v630 = vpop.f32.mrf.mxu0
        %631 = vmatprep.mubr.f32.mxu0 0.0
        %632 = vmatmul.mubr.f32.gmra.mxu0 %v549
        %v633 = vpop.f32.mrf.mxu0
        %v634 = vadd.f32 %v533, %v633
        %v635 = vpop.f32.mrf.mxu0
        %636 = vmatprep.mubr.f32.mxu0 0.0
        %637 = vmatmul.mubr.f32.gmra.mxu0 %v552
        %v638 = vpop.f32.mrf.mxu0
        %v639 = vadd.f32 %v538, %v638
        %v640 = vpop.f32.mrf.mxu0
        %641 = vdwg.mxu0
        %v642 = vld [vmem:[%s4] sm:$0x1]
        %v644 = vlaneseq
        %v645 = vshrl.u32 %v644, 7
        %v646 = vsub.s32 0, %v645
        %v647 = vrot.slane %v642, %v646
        %v649 = vadd.f32 %v624, %v647
        %v650 = vadd.f32 %v629, %v647
        %v651 = vadd.f32 %v634, %v647
        %v652 = vadd.f32 %v639, %v647
        %v653 = vmax.f32 %v649, 0.0
        %v654 = vmax.f32 %v650, 0.0
        %v655 = vmax.f32 %v651, 0.0
        %v656 = vmax.f32 %v652, 0.0
        %v657 = vpack.c.bf16 %v654, %v653
        %v658 = vpack.c.bf16 %v656, %v655
        %v659 = vld [vmem:[#allocation2] sm:$0xf]
        %v660 = vld [vmem:[#allocation2 + $0x4] sm:$0xf]
        %v661 = vld [vmem:[#allocation2 + $0x8] sm:$0xf]
        %v662 = vld [vmem:[#allocation2 + $0xc] sm:$0xf]
        %v663 = vld [vmem:[#allocation2 + $0x10] sm:$0xf]
        %v664 = vld [vmem:[#allocation2 + $0x14] sm:$0xf]
        %v665 = vld [vmem:[#allocation2 + $0x18] sm:$0xf]
        %v666 = vld [vmem:[#allocation2 + $0x1c] sm:$0xf]
        %v667 = vld [vmem:[#allocation2 + $0x20] sm:$0xf]
        %v668 = vld [vmem:[#allocation2 + $0x24] sm:$0xf]
        %v669 = vld [vmem:[#allocation2 + $0x28] sm:$0xf]
        %v670 = vld [vmem:[#allocation2 + $0x2c] sm:$0xf]
        %v671 = vld [vmem:[#allocation2 + $0x30] sm:$0xf]
        %v672 = vld [vmem:[#allocation2 + $0x34] sm:$0xf]
        %v673 = vld [vmem:[#allocation2 + $0x38] sm:$0xf]
        %v674 = vld [vmem:[#allocation2 + $0x3c] sm:$0xf]
        %v675 = vld [vmem:[%s6] sm:$0x1]
        %v677 = vlaneseq
        %v678 = vshrl.u32 %v677, 7
        %v679 = vsub.s32 0, %v678
        %v680 = vrot.slane %v675, %v679
        %v698 = vunpack.c.l.b16 %v659
        %v699 = vunpack.c.l.b16 %v660
        %v700 = vunpack.c.l.b16 %v661
        %v701 = vunpack.c.l.b16 %v662
        %v702 = vunpack.c.l.b16 %v663
        %v703 = vunpack.c.l.b16 %v664
        %v704 = vunpack.c.l.b16 %v665
        %v705 = vunpack.c.l.b16 %v666
        %v706 = vunpack.c.l.b16 %v667
        %v707 = vunpack.c.l.b16 %v668
        %v708 = vunpack.c.l.b16 %v669
        %v709 = vunpack.c.l.b16 %v670
        %v710 = vunpack.c.l.b16 %v671
        %v711 = vunpack.c.l.b16 %v672
        %v712 = vunpack.c.l.b16 %v673
        %v713 = vunpack.c.l.b16 %v674
        %v714 = vpack.c.b16 %v699, %v698
        %v715 = vpack.c.b16 %v701, %v700
        %v716 = vpack.c.b16 %v703, %v702
        %v717 = vpack.c.b16 %v705, %v704
        %v718 = vpack.c.b16 %v707, %v706
        %v719 = vpack.c.b16 %v709, %v708
        %v720 = vpack.c.b16 %v711, %v710
        %v721 = vpack.c.b16 %v713, %v712
        %730 = vmatprep.subr.bf16.mxu0 0
        %731 = vmatpush1.bf16.msra.mxu0 %v721
        %732 = vmatprep.subr.bf16.mxu0 0
        %733 = vmatpush1.bf16.msra.mxu0 %v720
        %734 = vmatprep.subr.bf16.mxu0 0
        %735 = vmatpush1.bf16.msra.mxu0 %v719
        %736 = vmatprep.subr.bf16.mxu0 0
        %737 = vmatpush1.bf16.msra.mxu0 %v718
        %738 = vmatprep.subr.bf16.mxu0 0
        %739 = vmatpush1.bf16.msra.mxu0 %v717
        %740 = vmatprep.subr.bf16.mxu0 0
        %741 = vmatpush1.bf16.msra.mxu0 %v716
        %742 = vmatprep.subr.bf16.mxu0 0
        %743 = vmatpush1.bf16.msra.mxu0 %v715
        %744 = vmatprep.subr.bf16.mxu0 0
        %745 = vmatpush1.bf16.msra.mxu0 %v714
        %746 = vmatprep.subr.bf16.mxu0 0
        %747 = vmatpush2.bf16.msra.mxu0 0
        %748 = vmatprep.subr.bf16.mxu0 0
        %749 = vmatpush2.bf16.msra.mxu0 0
        %750 = vmatprep.subr.bf16.mxu0 0
        %751 = vmatpush2.bf16.msra.mxu0 0
        %752 = vmatprep.subr.bf16.mxu0 0
        %753 = vmatpush2.bf16.msra.mxu0 0
        %754 = vmatprep.subr.bf16.mxu0 0
        %755 = vmatpush2.bf16.msra.mxu0 0
        %756 = vmatprep.subr.bf16.mxu0 0
        %757 = vmatpush2.bf16.msra.mxu0 0
        %758 = vmatprep.subr.bf16.mxu0 0
        %759 = vmatpush2.bf16.msra.mxu0 0
        %760 = vmatprep.subr.bf16.mxu0 0
        %761 = vmatpush2.bf16.msra.mxu0 0
        %762 = vmatprep.mubr.bf16.mxu0 0
        %763 = vmatmul.mubr.bf16.gmra.mxu0 %v657
        %v764 = vpop.f32.mrf.mxu0
        %v765 = vadd.f32 %v680, %v764
        %v766 = vpop.f32.mrf.mxu0
        %v767 = vpop.f32.mrf.mxu0
        %v768 = vadd.f32 %v680, %v767
        %v769 = vpop.f32.mrf.mxu0
        %770 = vmatprep.mubr.bf16.mxu0 0
        %771 = vmatmul.mubr.bf16.gmra.mxu0 %v658
        %v772 = vpop.f32.mrf.mxu0
        %v773 = vadd.f32 %v680, %v772
        %v774 = vpop.f32.mrf.mxu0
        %v775 = vpop.f32.mrf.mxu0
        %v776 = vadd.f32 %v680, %v775
        %v777 = vpop.f32.mrf.mxu0
        %778 = vdwg.mxu0
        %v779 = vmax.f32 %v765, 0.0
        %v780 = vmax.f32 %v768, 0.0
        %v781 = vmax.f32 %v773, 0.0
        %v782 = vmax.f32 %v776, 0.0
        %v783 = vpack.c.bf16 %v780, %v779
        %v784 = vpack.c.bf16 %v782, %v781
        %v785 = vld [vmem:[%s7] sm:$0xff]
        %v786 = vld [vmem:[%s7 + $0x8] sm:$0xff]
        %v787 = vld [vmem:[%s7 + $0x10] sm:$0xff]
        %v788 = vld [vmem:[%s7 + $0x18] sm:$0xff]
        %v789 = vld [vmem:[%s7 + $0x20] sm:$0xff]
        %v790 = vld [vmem:[%s7 + $0x28] sm:$0xff]
        %v791 = vld [vmem:[%s7 + $0x30] sm:$0xff]
        %v792 = vld [vmem:[%s7 + $0x38] sm:$0xff]
        %v793 = vld [vmem:[%s7 + $0x40] sm:$0xff]
        %v794 = vld [vmem:[%s7 + $0x48] sm:$0xff]
        %v795 = vld [vmem:[%s7 + $0x50] sm:$0xff]
        %v796 = vld [vmem:[%s7 + $0x58] sm:$0xff]
        %v797 = vld [vmem:[%s7 + $0x60] sm:$0xff]
        %v798 = vld [vmem:[%s7 + $0x68] sm:$0xff]
        %v799 = vld [vmem:[%s7 + $0x70] sm:$0xff]
        %v800 = vld [vmem:[%s7 + $0x78] sm:$0xff]
        %v801 = vld [vmem:[%s8] sm:$0x3]
        %v803 = vlaneseq
        %v804 = vshrl.u32 %v803, 7
        %v805 = vsub.s32 0, %v804
        %v806 = vrot.slane %v801, %v805
        %v807 = vlaneseq
        %v808 = vshrl.u32 %v807, 7
        %v809 = vsub.s32 1, %v808
        %v810 = vrot.slane %v801, %v809
        %v829 = vunpack.c.l.b16 %v785
        %v830 = vunpack.c.h.b16 %v785
        %v831 = vunpack.c.l.b16 %v786
        %v832 = vunpack.c.h.b16 %v786
        %v833 = vunpack.c.l.b16 %v787
        %v834 = vunpack.c.h.b16 %v787
        %v835 = vunpack.c.l.b16 %v788
        %v836 = vunpack.c.h.b16 %v788
        %v837 = vunpack.c.l.b16 %v789
        %v838 = vunpack.c.h.b16 %v789
        %v839 = vunpack.c.l.b16 %v790
        %v840 = vunpack.c.h.b16 %v790
        %v841 = vunpack.c.l.b16 %v791
        %v842 = vunpack.c.h.b16 %v791
        %v843 = vunpack.c.l.b16 %v792
        %v844 = vunpack.c.h.b16 %v792
        %v845 = vunpack.c.l.b16 %v793
        %v846 = vunpack.c.h.b16 %v793
        %v847 = vunpack.c.l.b16 %v794
        %v848 = vunpack.c.h.b16 %v794
        %v849 = vunpack.c.l.b16 %v795
        %v850 = vunpack.c.h.b16 %v795
        %v851 = vunpack.c.l.b16 %v796
        %v852 = vunpack.c.h.b16 %v796
        %v853 = vunpack.c.l.b16 %v797
        %v854 = vunpack.c.h.b16 %v797
        %v855 = vunpack.c.l.b16 %v798
        %v856 = vunpack.c.h.b16 %v798
        %v857 = vunpack.c.l.b16 %v799
        %v858 = vunpack.c.h.b16 %v799
        %v859 = vunpack.c.l.b16 %v800
        %v860 = vunpack.c.h.b16 %v800
        %v861 = vpack.c.b16 %v831, %v829
        %v862 = vpack.c.b16 %v832, %v830
        %v863 = vpack.c.b16 %v835, %v833
        %v864 = vpack.c.b16 %v836, %v834
        %v865 = vpack.c.b16 %v839, %v837
        %v866 = vpack.c.b16 %v840, %v838
        %v867 = vpack.c.b16 %v843, %v841
        %v868 = vpack.c.b16 %v844, %v842
        %v869 = vpack.c.b16 %v847, %v845
        %v870 = vpack.c.b16 %v848, %v846
        %v871 = vpack.c.b16 %v851, %v849
        %v872 = vpack.c.b16 %v852, %v850
        %v873 = vpack.c.b16 %v855, %v853
        %v874 = vpack.c.b16 %v856, %v854
        %v875 = vpack.c.b16 %v859, %v857
        %v876 = vpack.c.b16 %v860, %v858
        %893 = vmatprep.subr.bf16.mxu0 %v876
        %894 = vmatpush1.bf16.msra.mxu0 %v875
        %895 = vmatprep.subr.bf16.mxu0 %v874
        %896 = vmatpush1.bf16.msra.mxu0 %v873
        %897 = vmatprep.subr.bf16.mxu0 %v872
        %898 = vmatpush1.bf16.msra.mxu0 %v871
        %899 = vmatprep.subr.bf16.mxu0 %v870
        %900 = vmatpush1.bf16.msra.mxu0 %v869
        %901 = vmatprep.subr.bf16.mxu0 %v868
        %902 = vmatpush1.bf16.msra.mxu0 %v867
        %903 = vmatprep.subr.bf16.mxu0 %v866
        %904 = vmatpush1.bf16.msra.mxu0 %v865
        %905 = vmatprep.subr.bf16.mxu0 %v864
        %906 = vmatpush1.bf16.msra.mxu0 %v863
        %907 = vmatprep.subr.bf16.mxu0 %v862
        %908 = vmatpush1.bf16.msra.mxu0 %v861
        %909 = vmatprep.subr.bf16.mxu0 0
        %910 = vmatpush2.bf16.msra.mxu0 0
        %911 = vmatprep.subr.bf16.mxu0 0
        %912 = vmatpush2.bf16.msra.mxu0 0
        %913 = vmatprep.subr.bf16.mxu0 0
        %914 = vmatpush2.bf16.msra.mxu0 0
        %915 = vmatprep.subr.bf16.mxu0 0
        %916 = vmatpush2.bf16.msra.mxu0 0
        %917 = vmatprep.subr.bf16.mxu0 0
        %918 = vmatpush2.bf16.msra.mxu0 0
        %919 = vmatprep.subr.bf16.mxu0 0
        %920 = vmatpush2.bf16.msra.mxu0 0
        %921 = vmatprep.subr.bf16.mxu0 0
        %922 = vmatpush2.bf16.msra.mxu0 0
        %923 = vmatprep.subr.bf16.mxu0 0
        %924 = vmatpush2.bf16.msra.mxu0 0
        %925 = vmatprep.mubr.bf16.mxu0 0
        %926 = vmatmul.mubr.bf16.gmra.mxu0 %v783
        %v927 = vpop.f32.mrf.mxu0
        %v928 = vadd.f32 %v806, %v927
        %v929 = vpop.f32.mrf.mxu0
        %v930 = vadd.f32 %v810, %v929
        %v931 = vpop.f32.mrf.mxu0
        %v932 = vadd.f32 %v806, %v931
        %v933 = vpop.f32.mrf.mxu0
        %v934 = vadd.f32 %v810, %v933
        %935 = vmatprep.mubr.bf16.mxu0 0
        %936 = vmatmul.mubr.bf16.gmra.mxu0 %v784
        %v937 = vpop.f32.mrf.mxu0
        %v938 = vadd.f32 %v806, %v937
        %v939 = vpop.f32.mrf.mxu0
        %v940 = vadd.f32 %v810, %v939
        %v941 = vpop.f32.mrf.mxu0
        %v942 = vadd.f32 %v806, %v941
        %v943 = vpop.f32.mrf.mxu0
        %v944 = vadd.f32 %v810, %v943
        %945 = vdwg.mxu0
        %v946 = vadd.f32 %v928, 3.0
        %v947 = vadd.f32 %v930, 3.0
        %v948 = vadd.f32 %v932, 3.0
        %v949 = vadd.f32 %v934, 3.0
        %v950 = vadd.f32 %v938, 3.0
        %v951 = vadd.f32 %v940, 3.0
        %v952 = vadd.f32 %v942, 3.0
        %v953 = vadd.f32 %v944, 3.0
        %v954 = vmax.f32 %v946, 0.0
        %v955 = vmax.f32 %v947, 0.0
        %v956 = vmax.f32 %v948, 0.0
        %v957 = vmax.f32 %v949, 0.0
        %v958 = vmax.f32 %v950, 0.0
        %v959 = vmax.f32 %v951, 0.0
        %v960 = vmax.f32 %v952, 0.0
        %v961 = vmax.f32 %v953, 0.0
        %v962 = vmin.f32 %v954, 6.0
        %v963 = vmin.f32 %v955, 6.0
        %v964 = vmin.f32 %v956, 6.0
        %v965 = vmin.f32 %v957, 6.0
        %v966 = vmin.f32 %v958, 6.0
        %v967 = vmin.f32 %v959, 6.0
        %v968 = vmin.f32 %v960, 6.0
        %v969 = vmin.f32 %v961, 6.0
        %v970 = vmul.f32 %v928, %v962
        %v971 = vmul.f32 %v930, %v963
        %v972 = vmul.f32 %v932, %v964
        %v973 = vmul.f32 %v934, %v965
        %v974 = vmul.f32 %v938, %v966
        %v975 = vmul.f32 %v940, %v967
        %v976 = vmul.f32 %v942, %v968
        %v977 = vmul.f32 %v944, %v969
        %v978 = vmul.f32 %v970, 0.16666667
        %v979 = vmul.f32 %v971, 0.16666667
        %v980 = vmul.f32 %v972, 0.16666667
        %v981 = vmul.f32 %v973, 0.16666667
        %v982 = vmul.f32 %v974, 0.16666667
        %v983 = vmul.f32 %v975, 0.16666667
        %v984 = vmul.f32 %v976, 0.16666667
        %v985 = vmul.f32 %v977, 0.16666667
        %v986 = vld [vmem:[%s9] sm:$0x1]
        %v987 = vlaneseq
        %v988 = vshrl.u32 %v987, 7
        %v989 = vsub.s32 0, %v988
        %v990 = vrot.slane %v986, %v989
        %v991 = vmul.f32 %v978, %v990
        %v992 = vmul.f32 %v980, %v990
        %v993 = vmul.f32 %v982, %v990
        %v994 = vmul.f32 %v984, %v990
        %995 = vadd.xlane.f32.xlu0 %v991
        %v996 = vpop.xlane.xlu0 %995
        %997 = vadd.xlane.f32.xlu0 %v992
        %v998 = vpop.xlane.xlu0 %997
        %999 = vadd.xlane.f32.xlu0 %v993
        %v1000 = vpop.xlane.xlu0 %999
        %1001 = vadd.xlane.f32.xlu0 %v994
        %v1002 = vpop.xlane.xlu0 %1001
        %v1003 = vld [vmem:[%s9 + $0x1] sm:$0x1]
        %v1004 = vlaneseq
        %v1005 = vshrl.u32 %v1004, 7
        %v1006 = vsub.s32 0, %v1005
        %v1007 = vrot.slane %v1003, %v1006
        %v1008 = vmul.f32 %v979, %v1007
        %v1009 = vmul.f32 %v981, %v1007
        %v1010 = vmul.f32 %v983, %v1007
        %v1011 = vmul.f32 %v985, %v1007
        %1012 = vadd.xlane.f32.xlu0 %v1008
        %v1013 = vpop.xlane.xlu0 %1012
        %1014 = vadd.xlane.f32.xlu0 %v1009
        %v1015 = vpop.xlane.xlu0 %1014
        %1016 = vadd.xlane.f32.xlu0 %v1010
        %v1017 = vpop.xlane.xlu0 %1016
        %1018 = vadd.xlane.f32.xlu0 %v1011
        %v1019 = vpop.xlane.xlu0 %1018
        %v1020 = vld [vmem:[%s10] sm:$0x1]
        %v1022 = vlaneseq
        %v1023 = vshrl.u32 %v1022, 7
        %v1024 = vsub.s32 0, %v1023
        %v1025 = vrot.slane %v1020, %v1024
        %v1027 = vadd.f32 %v996, %v1025
        %v1028 = vadd.f32 %v998, %v1025
        %v1029 = vadd.f32 %v1000, %v1025
        %v1030 = vadd.f32 %v1002, %v1025
        %vm1031 = vcmask 7168
        %1032 = vst.msk [vmem:[%s425] sm:$0xff] %vm1031, %v1027
        %1033 = vst.msk [vmem:[%s425 + $0x8] sm:$0xff] %vm1031, %v1028
        %1034 = vst.msk [vmem:[%s425 + $0x10] sm:$0xff] %vm1031, %v1029
        %1035 = vst.msk [vmem:[%s425 + $0x18] sm:$0xff] %vm1031, %v1030
        %v1036 = vld [vmem:[%s10] sm:$0x1]
        %v1038 = vlaneseq
        %v1039 = vshrl.u32 %v1038, 7
        %v1040 = vsub.s32 0, %v1039
        %v1041 = vrot.slane %v1036, %v1040
        %v1043 = vadd.f32 %v1013, %v1041
        %v1044 = vadd.f32 %v1015, %v1041
        %v1045 = vadd.f32 %v1017, %v1041
        %v1046 = vadd.f32 %v1019, %v1041
        %vm1047 = vcmask 15368
        %1048 = vst.msk [vmem:[%s425] sm:$0xff] %vm1047, %v1043
        %1049 = vst.msk [vmem:[%s425 + $0x8] sm:$0xff] %vm1047, %v1044
        %1050 = vst.msk [vmem:[%s425 + $0x10] sm:$0xff] %vm1047, %v1045
        %1051 = vst.msk [vmem:[%s425 + $0x18] sm:$0xff] %vm1047, %v1046
        %s1052 = smul.u32 4, %s23
        %p1053 = scmp.lt.s32.totalorder %s1052, 7
        %s1054 = scalar_select %p1053, %s1052, 7
        %s1055 = smul.addr %s1054, 8
        %s1056 = scalar_lea.vmem %s11, %s1055
        // Predicated region
        $region69: #{tpu_custom_call.1} parent=63 // pred_check
          %p1057 = pneg %p282
        $region70: #{tpu_custom_call.1} parent=63 // pred_check_branch
          %1059 = sbr.rel (%p1057) target = $region72
        $region71: #{tpu_custom_call.1} parent=63 // pred_region
          %s1060 = smul.u32 4, %s23
        $region72: #{tpu_custom_call.1} parent=63 // pred_fallthru
          _
      $region64: #{tpu_custom_call.1} parent=5 // pred_fallthru
        _
      %p1061 = scmp.le.s32.totalorder 2, %s18
      // Predicated region
      $region73: #{tpu_custom_call.1} parent=5 // pred_check
        %p1062 = pneg %p1061
      $region74: #{tpu_custom_call.1} parent=5 // pred_check_branch
        %1064 = sbr.rel (%p1062) target = $region76
      $region75: #{tpu_custom_call.1} parent=5 // pred_region
        %s1065 = ssub.s32 %s18, 2
        // Predicated region
        $region77: #{tpu_custom_call.1} parent=75 // pred_check
          %p1066 = pneg %p288
        $region78: #{tpu_custom_call.1} parent=75 // pred_check_branch
          %1068 = sbr.rel (%p1066) target = $region80
        $region79: #{tpu_custom_call.1} parent=75 // pred_region
          %s1069 = smul.u32 4, %s24
          %p1070 = scmp.lt.s32.totalorder %s1069, 7
          %s1071 = scalar_select %p1070, %s1069, 7
          %s1072 = smul.addr %s1071, 8
          %s1073 = scalar_lea.vmem %s11, %s1072
        $region80: #{tpu_custom_call.1} parent=75 // pred_fallthru
          _
      $region76: #{tpu_custom_call.1} parent=5 // pred_fallthru
        _
    $region6: #{tpu_custom_call.1} parent=1 // loop_footer
      %s22 = sadd.s32 1, %s18
    $region7: #{tpu_custom_call.1} parent=1 // loop_footer_branch
      %17 = sbr.rel target = $region3
    $region8: #{tpu_custom_call.1} parent=1 // loop_exit
      _
    %1074 = vsyncpa [#allocation3], 1
    %s1075 = scalar_lea.sflag [#allocation3], 1
    %1076 = vsyncpa %s1075, 1

</llo_original>
